<compile_context>
chip_gen: v6e
topology: v6e:2x2x1
jax: 0.10.0
libtpu: 0.0.40
codegen_flags: <defaults>
</compile_context>

<pallas_src>
import functools

import jax
import jax.numpy as jnp
from jax.experimental import pallas as pl
from jax.experimental.pallas import tpu as pltpu


def _fused_linear_kernel(x_ref, w_ref, b_ref, o_ref):
    # Single MXU matmul with f32 accumulation; bias broadcast on the VPU.
    # x is cast in-register (free) instead of in the wrapper (extra HBM pass).
    x = x_ref[...].astype(w_ref.dtype)
    o_ref[...] = (
        jnp.dot(x, w_ref[...], preferred_element_type=jnp.float32)
        + b_ref[...].astype(jnp.float32)
    ).astype(o_ref.dtype)


def prepare_fused_params(params, dtype=jnp.float32):
    """Fold the affine chain into one (W_total, b_total). Called ONCE at init.

    params: list of (W, b) with W shaped (out, in), b shaped (out,) — the
    nn.Linear convention. Folding is done in f32, then cast to `dtype`
    (f32 default for exact validation; bf16 for throughput on v5e whose MXU
    has no native f32 path).
    """
    (w1, b1), *rest = params
    w_total = w1.astype(jnp.float32).T          # (in, 64)
    b_total = b1.astype(jnp.float32)            # (64,)
    for w, b in rest:
        w32 = w.astype(jnp.float32)
        w_total = w_total @ w32.T               # (in, next_out)
        b_total = b_total @ w32.T + b.astype(jnp.float32)

    # Keep W/b UNPADDED: (in, out) and (1, out). Legal as Pallas blocks since
    # the block dims equal the full array dims, and it keeps the output HBM
    # writeback at out_features wide (no 128-wide zero slab).
    return w_total.astype(dtype), b_total.reshape(1, -1).astype(dtype)


def _round_up(x, m):
    return ((x + m - 1) // m) * m


@functools.partial(jax.jit, static_argnames=("max_tb",))
def linear_model_forward(x, fused_params, *, max_tb=8192):
    """x: (batch, in_features). fused_params: output of prepare_fused_params."""
    w_total, b_total = fused_params
    batch, in_features = x.shape
    out_features = w_total.shape[1]

    # Batch tile:
    #  - tiny batch (<= 8): one block equal to the full batch (legal: block
    #    dim equals the full array dim).
    #  - otherwise: at least 2 grid steps (so v7x can shard the "parallel"
    #    batch axis across its two TensorCores), each a multiple of 8 rows,
    #    capped at max_tb to amortize per-step pipeline overhead.
    if batch <= 8:
        tb = batch
    else:
        tb = min(max_tb, _round_up(pl.cdiv(batch, 2), 8))
    grid = (pl.cdiv(batch, tb),)

    # NOTE: when batch % tb != 0 the last grid step reads rows past the end of
    # x; this is fine ONLY because the kernel is purely row-wise (no cross-row
    # reduction) and the corresponding output rows are masked on writeback.
    cost = pl.CostEstimate(
        flops=2 * batch * in_features * out_features,
        transcendentals=0,
        bytes_accessed=(
            x.size * x.dtype.itemsize
            + w_total.size * w_total.dtype.itemsize
            + b_total.size * b_total.dtype.itemsize
            + batch * out_features * x.dtype.itemsize
        ),
    )

    out = pl.pallas_call(
        _fused_linear_kernel,
        out_shape=jax.ShapeDtypeStruct((batch, out_features), x.dtype),
        grid_spec=pltpu.PrefetchScalarGridSpec(
            num_scalar_prefetch=0,
            grid=grid,
            in_specs=[
                # x: tiled along batch.
                pl.BlockSpec((tb, in_features), lambda i: (i, 0)),
                # Fused weight / bias: constant index_map -> VMEM-resident,
                # fetched once (a few KB).
                pl.BlockSpec((in_features, out_features), lambda i: (0, 0)),
                pl.BlockSpec((1, out_features), lambda i: (0, 0)),
            ],
            # Unpadded (tb, out_features) output block: the writeback DMA only
            # moves the real out_features columns (no 128-wide zero slab).
            out_specs=pl.BlockSpec((tb, out_features), lambda i: (i, 0)),
        ),
        compiler_params=pltpu.CompilerParams(
            # Batch axis is independent -> shard across TensorCores (v7x).
            dimension_semantics=("parallel",),
        ),
        cost_estimate=cost,
    )(x, w_total, b_total)

    return out


def init_params(key, input_feature, output_feature):
    """Deterministic init mirroring nn.Linear shapes (W: (out, in), b: (out,))."""
    dims = [input_feature, 64, 32, 16, output_feature]
    params = []
    for i in range(len(dims) - 1):
        fan_in, fan_out = dims[i], dims[i + 1]
        key, wk, bk = jax.random.split(key, 3)
        bound = 1.0 / jnp.sqrt(fan_in)
        w = jax.random.uniform(wk, (fan_out, fan_in), jnp.float32, -bound, bound)
        b = jax.random.uniform(bk, (fan_out,), jnp.float32, -bound, bound)
        params.append((w, b))
    return params


if __name__ == "__main__":
    key = jax.random.PRNGKey(0)
    key, xk = jax.random.split(key)

    batch = 2
    input_feature = 32
    output_feature = 8

    x = jax.random.normal(xk, (batch, input_feature), jnp.float32)
    params = init_params(key, input_feature, output_feature)

    # One-time fusion of the affine chain (host/XLA side, not per call).
    # f32 fold+compute -> exact vs. the layer-by-layer f32 reference.
    fused = prepare_fused_params(params, dtype=jnp.float32)

    out = linear_model_forward(x, fused)
    jax.block_until_ready(out)

    # Reference check in plain JAX (same math as the PyTorch module, un-fused).
    ref = x
    for w, b in params:
        ref = ref @ w.T + b
    assert out.shape == (batch, output_feature)
    # NOTE: with dtype=jnp.bfloat16 in prepare_fused_params, loosen tolerances.
    assert jnp.allclose(out, ref, atol=1e-4, rtol=1e-4)

    print("KERNEL_OK")
</pallas_src>

<mosaic_0001>
module attributes {stable_mosaic.version = 11 : i64} {
  func.func @_fused_linear_kernel(%arg0: i32, %arg1: memref<2x32xf32, #tpu.memory_space<vmem>>, %arg2: memref<32x8xf32, #tpu.memory_space<vmem>>, %arg3: memref<1x8xf32, #tpu.memory_space<vmem>>, %arg4: memref<2x8xf32, #tpu.memory_space<vmem>>) attributes {dimension_semantics = [#tpu.dimension_semantics<parallel>], iteration_bounds = array<i64: 1>, scalar_prefetch = 0 : i64, scratch_operands = 0 : i64, tpu.core_type = #tpu.core_type<tc>, window_params = [{transform_indices = @transform_0, window_bounds = array<i64: 2, 32>}, {pipeline_mode = #tpu.pipeline_mode<synchronous>, transform_indices = @transform_1, window_bounds = array<i64: 32, 8>}, {pipeline_mode = #tpu.pipeline_mode<synchronous>, transform_indices = @transform_2, window_bounds = array<i64: 1, 8>}, {transform_indices = @transform_3, window_bounds = array<i64: 2, 8>}]} {
    %c0 = arith.constant 0 : index
    %c0_0 = arith.constant 0 : index
    %0 = vector.load %arg1[%c0, %c0_0] : memref<2x32xf32, #tpu.memory_space<vmem>>, vector<2x32xf32>
    %c0_1 = arith.constant 0 : index
    %c0_2 = arith.constant 0 : index
    %1 = vector.load %arg2[%c0_1, %c0_2] : memref<32x8xf32, #tpu.memory_space<vmem>>, vector<32x8xf32>
    %cst = arith.constant dense<0.000000e+00> : vector<2x8xf32>
    %2 = tpu.matmul %0, %1, %cst {dimension_numbers = #tpu.dot_dimension_numbers<[1], [0], [0], [1], [0, 0, 1, 1], [], []>} : vector<2x32xf32>, vector<32x8xf32>, vector<2x8xf32> -> vector<2x8xf32>
    %c0_3 = arith.constant 0 : index
    %c0_4 = arith.constant 0 : index
    %3 = vector.load %arg3[%c0_3, %c0_4] : memref<1x8xf32, #tpu.memory_space<vmem>>, vector<1x8xf32>
    %4 = vector.broadcast %3 : vector<1x8xf32> to vector<2x8xf32>
    %5 = arith.addf %2, %4 : vector<2x8xf32>
    %c0_5 = arith.constant 0 : index
    %c0_6 = arith.constant 0 : index
    %6 = vector.load %arg4[%c0_5, %c0_6] : memref<2x8xf32, #tpu.memory_space<vmem>>, vector<2x8xf32>
    tpu.vector_store %arg4[%c0_5, %c0_6], %5 {strides = array<i32>} : memref<2x8xf32, #tpu.memory_space<vmem>>, vector<2x8xf32>,
    return
  }
  func.func @transform_0(%arg0: i32) -> (i32, i32) {
    %c0_i32 = arith.constant 0 : i32
    %c0_i32_0 = arith.constant 0 : i32
    return %arg0, %c0_i32 : i32, i32
  }
  func.func @transform_1(%arg0: i32) -> (i32, i32) {
    %c0_i32 = arith.constant 0 : i32
    %c0_i32_0 = arith.constant 0 : i32
    %c0_i32_1 = arith.constant 0 : i32
    return %c0_i32, %c0_i32_0 : i32, i32
  }
  func.func @transform_2(%arg0: i32) -> (i32, i32) {
    %c0_i32 = arith.constant 0 : i32
    %c0_i32_0 = arith.constant 0 : i32
    %c0_i32_1 = arith.constant 0 : i32
    return %c0_i32, %c0_i32_0 : i32, i32
  }
  func.func @transform_3(%arg0: i32) -> (i32, i32) {
    %c0_i32 = arith.constant 0 : i32
    %c0_i32_0 = arith.constant 0 : i32
    return %arg0, %c0_i32 : i32, i32
  }
}

</mosaic_0001>

<llo_original>
// kernel: linear_model_forward.1
$region0: #{linear_model_forward.1}
  #allocation0 [shape = 'u32[]', space=smem, size = 0x4, offset = 0x4, fixed_abs, tag = 'smem constant byte address 0x4 - core index']
  #allocation1 [shape = 'u32[144,128]{1,0:T(1,128)}', space=vmem, size = 0x12000, scoped, tag = 'internal scratch']
  %s0 = inlined_call_operand.vmem [shape: f32[2,32], index: 0, kind: input, shape index: {}]
  %s1 = inlined_call_operand.vmem [shape: f32[32,8], index: 1, kind: input, shape index: {}]
  %s2 = inlined_call_operand.vmem [shape: f32[1,8], index: 2, kind: input, shape index: {}]
  %s3 = inlined_call_operand.hbm [shape: f32[2,8], index: 3, kind: output, shape index: {}]
  %s4 = sld [smem:[#allocation0]]
  $region22: #{linear_model_forward.1} parent=0
    _
  %s6 = ssub.s32 1, %s4
  %s7 = scalar_select 0, %s6, %s4
  $region1: #{linear_model_forward.1} parent=0
    #allocation2 [shape = 'u8[1024]{0}', space=vmem, size = 0x400, scoped, tag = 'output window, operand 0, single buffered']
    #allocation3 [shape = 's32[1]{0}', space=sflag, size = 0x4, scoped, tag = 'scoped memory for linear_model_forward.1']
    %8 = vsyncpa [#allocation3], 0
    // Predicated region
    $region2: #{linear_model_forward.1} parent=1 // pred_check
      _
    $region3: #{linear_model_forward.1} parent=1 // pred_check_branch
      %10 = sbr.rel (0) target = $region5
    $region4: #{linear_model_forward.1} parent=1 // pred_region
      _
    $region5: #{linear_model_forward.1} parent=1 // pred_fallthru
      _
    // Predicated region
    $region6: #{linear_model_forward.1} parent=1 // pred_check
      _
    $region7: #{linear_model_forward.1} parent=1 // pred_check_branch
      %12 = sbr.rel (0) target = $region9
    $region8: #{linear_model_forward.1} parent=1 // pred_region
      _
    $region9: #{linear_model_forward.1} parent=1 // pred_fallthru
      _
    // Predicated region
    $region10: #{linear_model_forward.1} parent=1 // pred_check
      _
    $region11: #{linear_model_forward.1} parent=1 // pred_check_branch
      %14 = sbr.rel (0) target = $region13
    $region12: #{linear_model_forward.1} parent=1 // pred_region
      _
    $region13: #{linear_model_forward.1} parent=1 // pred_fallthru
      _
    %v15 = vld [vmem:[%s0] sm:$0x3]
    %v16 = vld [vmem:[%s1] sm:$0xff]
    %v17 = vld [vmem:[%s1 + $0x8] sm:$0xff]
    %v18 = vld [vmem:[%s1 + $0x10] sm:$0xff]
    %v19 = vld [vmem:[%s1 + $0x18] sm:$0xff]
    %v20 = vld [vmem:[%s2] sm:$0x1]
    %v22 = vlaneseq
    %v23 = vshrl.u32 %v22, 7
    %v24 = vsub.s32 0, %v23
    %v25 = vrot.slane %v20, %v24
    %vm27 = vcmask 261120
    %v29 = vsel %vm27, %v15, 0
    %31 = vmatprep.subr.mxu0 0.0
    %32 = vmatpush1.msra.mxu0 0.0
    %33 = vmatprep.subr.mxu0 0.0
    %34 = vmatpush1.msra.mxu0 0.0
    %35 = vmatprep.subr.mxu0 0.0
    %36 = vmatpush1.msra.mxu0 0.0
    %37 = vmatprep.subr.mxu0 0.0
    %38 = vmatpush1.msra.mxu0 0.0
    %39 = vmatprep.subr.mxu0 0.0
    %40 = vmatpush1.msra.mxu0 0.0
    %41 = vmatprep.subr.mxu0 0.0
    %42 = vmatpush1.msra.mxu0 0.0
    %43 = vmatprep.subr.mxu0 0.0
    %44 = vmatpush1.msra.mxu0 0.0
    %45 = vmatprep.subr.mxu0 0.0
    %46 = vmatpush1.msra.mxu0 0.0
    %47 = vmatprep.subr.mxu0 0.0
    %48 = vmatpush1.msra.mxu0 0.0
    %49 = vmatprep.subr.mxu0 0.0
    %50 = vmatpush1.msra.mxu0 0.0
    %51 = vmatprep.subr.mxu0 0.0
    %52 = vmatpush1.msra.mxu0 0.0
    %53 = vmatprep.subr.mxu0 0.0
    %54 = vmatpush1.msra.mxu0 0.0
    %55 = vmatprep.subr.mxu0 0.0
    %56 = vmatpush1.msra.mxu0 %v19
    %57 = vmatprep.subr.mxu0 0.0
    %58 = vmatpush1.msra.mxu0 %v18
    %59 = vmatprep.subr.mxu0 0.0
    %60 = vmatpush1.msra.mxu0 %v17
    %61 = vmatprep.subr.mxu0 0.0
    %62 = vmatpush1.msra.mxu0 %v16
    %63 = vmatprep.subr.mxu0 0.0
    %64 = vmatpush2.msra.mxu0 0.0
    %65 = vmatprep.subr.mxu0 0.0
    %66 = vmatpush2.msra.mxu0 0.0
    %67 = vmatprep.subr.mxu0 0.0
    %68 = vmatpush2.msra.mxu0 0.0
    %69 = vmatprep.subr.mxu0 0.0
    %70 = vmatpush2.msra.mxu0 0.0
    %71 = vmatprep.subr.mxu0 0.0
    %72 = vmatpush2.msra.mxu0 0.0
    %73 = vmatprep.subr.mxu0 0.0
    %74 = vmatpush2.msra.mxu0 0.0
    %75 = vmatprep.subr.mxu0 0.0
    %76 = vmatpush2.msra.mxu0 0.0
    %77 = vmatprep.subr.mxu0 0.0
    %78 = vmatpush2.msra.mxu0 0.0
    %79 = vmatprep.subr.mxu0 0.0
    %80 = vmatpush2.msra.mxu0 0.0
    %81 = vmatprep.subr.mxu0 0.0
    %82 = vmatpush2.msra.mxu0 0.0
    %83 = vmatprep.subr.mxu0 0.0
    %84 = vmatpush2.msra.mxu0 0.0
    %85 = vmatprep.subr.mxu0 0.0
    %86 = vmatpush2.msra.mxu0 0.0
    %87 = vmatprep.subr.mxu0 0.0
    %88 = vmatpush2.msra.mxu0 0.0
    %89 = vmatprep.subr.mxu0 0.0
    %90 = vmatpush2.msra.mxu0 0.0
    %91 = vmatprep.subr.mxu0 0.0
    %92 = vmatpush2.msra.mxu0 0.0
    %93 = vmatprep.subr.mxu0 0.0
    %94 = vmatpush2.msra.mxu0 0.0
    %95 = vmatprep.mubr.f32.mxu0 0.0
    %96 = vmatmul.mubr.f32.gmra.mxu0 %v29
    %v97 = vpop.f32.mrf.mxu0
    %v98 = vadd.f32 %v25, %v97
    %v99 = vpop.f32.mrf.mxu0
    %100 = vdwg.mxu0
    %vm101 = vcmask 58368
    %102 = vst.msk [vmem:[#allocation2] sm:$0x3] %vm101, %v98
    // Predicated region
    $region14: #{linear_model_forward.1} parent=1 // pred_check
      _
    $region15: #{linear_model_forward.1} parent=1 // pred_check_branch
      %104 = sbr.rel (0) target = $region17
    $region16: #{linear_model_forward.1} parent=1 // pred_region
      %s106 = ssub.s32 32, 32
      %107 = vsyncadd [#allocation3], %s106
      %s109 = sshll.u32 [#allocation2], 4
      %s110 = int_to_ptr.vmem [resolvable:$true] %s109
      %112 = dma.vmem_to_hbm [thread:$0]  %s110, 32, %s3, [#allocation3]
    $region17: #{linear_model_forward.1} parent=1 // pred_fallthru
      _
    // Predicated region
    $region18: #{linear_model_forward.1} parent=1 // pred_check
      _
    $region19: #{linear_model_forward.1} parent=1 // pred_check_branch
      %114 = sbr.rel (0) target = $region21
    $region20: #{linear_model_forward.1} parent=1 // pred_region
      %115 = dma.done [#allocation3], 32
    $region21: #{linear_model_forward.1} parent=1 // pred_fallthru
      _
    %116 = vsyncpa [#allocation3], 1

</llo_original>
